<compile_context>
chip_gen: v7x
topology: tpu7x:2x2x1
jax: 0.10.0
libtpu: 0.0.40
codegen_flags: <defaults>
</compile_context>

<pallas_src>
import math

import jax
import jax.numpy as jnp
from jax.experimental import pallas as pl
from jax.experimental.pallas import tpu as pltpu


def _round_up(x, m):
    return ((x + m - 1) // m) * m


def _vmem_capacity_bytes():
    try:
        info = pltpu.get_tpu_info()
        cap = int(getattr(info, "vmem_capacity_bytes", 0))
        if cap > 0:
            return cap
    except Exception:
        pass
    return 64 * 1024 * 1024          # conservative (v7x-sized) fallback


def _pick_reduction_tile(in_f):
    """Tile for the in_features (contraction) grid axis.

    Must be a multiple of 128 (lane dim of the x block) unless it equals the
    full in_features, and must divide in_features exactly so no garbage columns
    enter the accumulation.
    """
    if in_f <= 1024:
        return in_f
    for t in (1024, 512, 256, 128):
        if in_f % t == 0:
            return t
    return in_f   # odd size: single full-width block (exempt from (8,128) rule)


# ---------------------------------------------------------------------------
# Kernels
# ---------------------------------------------------------------------------
def _chain_kernel(x_ref, a_ref, c_ref, b_ref, o_ref, t1_ref):
    # grid = (i: row tiles [parallel], r: in_f reduction tiles [arbitrary])
    # x:(tm,tr)  a:(tr,kp)  c:(kp,out_p)  b:(1,out_p)  o:(tm,out_p)  t1:(tm,kp) f32
    r = pl.program_id(1)

    @pl.when(r == 0)
    def _():
        t1_ref[...] = jnp.zeros_like(t1_ref)

    # First GEMM, accumulated over the in_f reduction axis (computed once per
    # row tile; bf16 MXU path when params are bf16, f32 accumulation).
    xb = x_ref[...].astype(a_ref.dtype)
    t1_ref[...] += jnp.dot(xb, a_ref[...], preferred_element_type=jnp.float32)

    @pl.when(r == pl.num_programs(1) - 1)
    def _():
        # Second GEMM + fused bias add + cast, single lane-dense store.
        t1 = t1_ref[...].astype(c_ref.dtype)
        y = jnp.dot(t1, c_ref[...], preferred_element_type=jnp.float32)
        o_ref[...] = (y + b_ref[...].astype(jnp.float32)).astype(o_ref.dtype)


def _dense_kernel(x_ref, w_ref, b_ref, o_ref, acc_ref):
    # grid = (i [parallel], j [parallel], r: in_f reduction [arbitrary])
    # x:(tm,tr)  w:(tr,tn)  b:(1,tn)  o:(tm,tn)  acc:(tm,tn) f32
    r = pl.program_id(2)

    @pl.when(r == 0)
    def _():
        acc_ref[...] = jnp.zeros_like(acc_ref)

    xb = x_ref[...].astype(w_ref.dtype)
    acc_ref[...] += jnp.dot(xb, w_ref[...], preferred_element_type=jnp.float32)

    @pl.when(r == pl.num_programs(2) - 1)
    def _():
        o_ref[...] = (acc_ref[...] + b_ref[...].astype(jnp.float32)).astype(o_ref.dtype)


# ---------------------------------------------------------------------------
# pallas_call wrappers
# ---------------------------------------------------------------------------
def _call_chain(x2d, a, c, bias2d, *, tm, tr, vmem_limit):
    M, in_f = x2d.shape
    kp = a.shape[1]
    out_p = c.shape[1]
    nr = max(1, in_f // tr)
    grid = (pl.cdiv(M, tm), nr)

    flops = 2 * M * in_f * kp + 2 * M * kp * out_p
    bytes_accessed = (x2d.size * x2d.dtype.itemsize
                      + a.size * a.dtype.itemsize
                      + c.size * c.dtype.itemsize
                      + bias2d.size * bias2d.dtype.itemsize
                      + M * out_p * x2d.dtype.itemsize)

    return pl.pallas_call(
        _chain_kernel,
        out_shape=jax.ShapeDtypeStruct((M, out_p), x2d.dtype),
        grid_spec=pltpu.PrefetchScalarGridSpec(
            num_scalar_prefetch=0,
            grid=grid,
            in_specs=[
                pl.BlockSpec((tm, tr), lambda i, r: (i, r)),       # x (K-tiled)
                pl.BlockSpec((tr, kp), lambda i, r: (r, 0)),       # A (K-tiled)
                pl.BlockSpec((kp, out_p), lambda i, r: (0, 0)),    # C (resident)
                pl.BlockSpec((1, out_p), lambda i, r: (0, 0)),     # bias
            ],
            out_specs=pl.BlockSpec((tm, out_p), lambda i, r: (i, 0)),
            scratch_shapes=[pltpu.VMEM((tm, kp), jnp.float32)],    # t1 accumulator
        ),
        compiler_params=pltpu.CompilerParams(
            dimension_semantics=("parallel", "arbitrary"),
            vmem_limit_bytes=vmem_limit,
        ),
        cost_estimate=pl.CostEstimate(
            flops=int(flops), transcendentals=0, bytes_accessed=int(bytes_accessed)),
    )(x2d, a, c, bias2d)


def _call_dense(x2d, w, bias2d, *, tm, tn, tr, vmem_limit):
    M, in_f = x2d.shape
    out_p = w.shape[1]
    nr = max(1, in_f // tr)
    grid = (pl.cdiv(M, tm), out_p // tn, nr)

    flops = 2 * M * in_f * out_p
    bytes_accessed = (x2d.size * x2d.dtype.itemsize
                      + w.size * w.dtype.itemsize
                      + bias2d.size * bias2d.dtype.itemsize
                      + M * out_p * x2d.dtype.itemsize)

    return pl.pallas_call(
        _dense_kernel,
        out_shape=jax.ShapeDtypeStruct((M, out_p), x2d.dtype),
        grid_spec=pltpu.PrefetchScalarGridSpec(
            num_scalar_prefetch=0,
            grid=grid,
            in_specs=[
                pl.BlockSpec((tm, tr), lambda i, j, r: (i, r)),    # x (K-tiled)
                pl.BlockSpec((tr, tn), lambda i, j, r: (r, j)),    # W (K-tiled)
                pl.BlockSpec((1, tn), lambda i, j, r: (0, j)),     # bias
            ],
            out_specs=pl.BlockSpec((tm, tn), lambda i, j, r: (i, j)),
            scratch_shapes=[pltpu.VMEM((tm, tn), jnp.float32)],    # f32 accumulator
        ),
        compiler_params=pltpu.CompilerParams(
            dimension_semantics=("parallel", "parallel", "arbitrary"),
            vmem_limit_bytes=vmem_limit,
        ),
        cost_estimate=pl.CostEstimate(
            flops=int(flops), transcendentals=0, bytes_accessed=int(bytes_accessed)),
    )(x2d, w, bias2d)


# ---------------------------------------------------------------------------
# Module-like wrapper holding the factorized parameters (u, s, vh, bias).
# ---------------------------------------------------------------------------
class SVDLinearUSVhPallas:
    def __init__(self, in_features, out_features, bias=True,
                 inner_dim_init_ratio=1.0, key=None, dtype=jnp.float32,
                 param_dtype=jnp.bfloat16, tm=256):
        if key is None:
            key = jax.random.PRNGKey(0)
        kw, kb = jax.random.split(key)

        self.in_features = in_features
        self.out_features = out_features
        self.dtype = dtype
        self.param_dtype = param_dtype
        self.tm_req = int(tm)

        # kaiming_uniform_(a=sqrt(5)) on (out, in) => U(-1/sqrt(in), 1/sqrt(in))
        bound_w = 1.0 / math.sqrt(in_features)
        weight = jax.random.uniform(
            kw, (out_features, in_features), dtype=dtype,
            minval=-bound_w, maxval=bound_w)

        # SVD of weight (or weight.T if out < in), truncated by inner_dim_init_ratio.
        self.trans = out_features < in_features
        w = weight.T if self.trans else weight
        u, s, vh = jnp.linalg.svd(w.astype(jnp.float32), full_matrices=False)
        r = s.shape[0]
        inner_dim = int(r * inner_dim_init_ratio)
        inner_dim = max(1, min(inner_dim, r))
        self.inner_dim = inner_dim
        self.u = u[:, :inner_dim].astype(dtype)             # (rows, k)
        self.s = jnp.diag(s[:inner_dim]).astype(dtype)      # (k, k) dense diag
        self.vh = vh[:inner_dim].astype(dtype)              # (k, cols)

        if bias:
            bound_b = 1.0 / math.sqrt(in_features)
            self.bias = jax.random.uniform(
                kb, (out_features,), dtype=dtype,
                minval=-bound_b, maxval=bound_b)
        else:
            # zero bias added (cheap VPU op); keeps kernel signature uniform
            self.bias = jnp.zeros((out_features,), dtype=dtype)

        # ---- Fold sigma into A once; unified operands  y = (x @ A) @ C + b ----
        if self.trans:
            A = self.u @ self.s            # (in_f, k)
            C = self.vh                    # (k, out_f)
        else:
            A = (self.s @ self.vh).T       # (in_f, k)
            C = self.u.T                   # (k, out_f)

        k = inner_dim
        pdt = self.param_dtype
        self.out_p = _round_up(out_features, 128)   # lane-dense output columns
        self.kp = _round_up(k, 8)                   # minimal rank padding (not 128)
        self.tr = _pick_reduction_tile(in_features) # in_f reduction tile
        self.vmem_cap = _vmem_capacity_bytes()
        self.vmem_budget = int(0.75 * self.vmem_cap)

        self.bias_p = (jnp.zeros((1, self.out_p), pdt)
                       .at[0, :out_features].set(self.bias.astype(pdt)))

        # Dense output tile (multiple of 128 dividing out_p; larger on big-VMEM gens).
        if self.out_p <= 512:
            self.tn = self.out_p
        elif self.vmem_budget >= 80 * 1024 * 1024 and self.out_p % 1024 == 0:
            self.tn = 1024
        elif self.out_p % 512 == 0:
            self.tn = 512
        elif self.out_p % 256 == 0:
            self.tn = 256
        else:
            self.tn = 128

        # Dense fallback when the factored chain (with the padded shapes actually
        # run) is at least as much MXU work as a single dense GEMM, or when the
        # chain's resident C / output row-block cannot fit the VMEM budget.
        self.use_dense = (self.kp * (in_features + self.out_p)
                          >= in_features * self.out_p)
        if not self.use_dense and self._chain_footprint(64) > self.vmem_budget:
            # TODO(synk): tile out_features inside the chain kernel for extremely
            # wide layers instead of falling back to the dense path.
            self.use_dense = True

        if self.use_dense:
            W = A @ C                                    # (in_f, out_f), once at init
            self.W_p = (jnp.zeros((in_features, self.out_p), pdt)
                        .at[:, :out_features].set(W.astype(pdt)))
            self.A_p = None
            self.C_p = None
        else:
            self.W_p = None
            self.A_p = (jnp.zeros((in_features, self.kp), pdt)
                        .at[:, :k].set(A.astype(pdt)))
            self.C_p = (jnp.zeros((self.kp, self.out_p), pdt)
                        .at[:k, :out_features].set(C.astype(pdt)))

    # ---- VMEM footprint estimates (double-buffered blocks + scratch) ----------
    def _chain_footprint(self, tm):
        xb = jnp.dtype(self.dtype).itemsize
        wb = jnp.dtype(self.param_dtype).itemsize
        tr, kp, out_p = self.tr, self.kp, self.out_p
        est = 2 * tm * tr * xb           # x tile
        est += 2 * tr * kp * wb          # A tile
        est += 2 * kp * out_p * wb       # C (constant index map, 2 buffers assumed)
        est += 2 * out_p * wb            # bias
        est += 2 * tm * out_p * xb       # output row-block
        est += tm * kp * 4               # t1 f32 scratch
        return est

    def _dense_footprint(self, tm):
        xb = jnp.dtype(self.dtype).itemsize
        wb = jnp.dtype(self.param_dtype).itemsize
        tr, tn = self.tr, self.tn
        est = 2 * tm * tr * xb + 2 * tr * tn * wb + 2 * tn * wb
        est += 2 * tm * tn * xb + tm * tn * 4
        return est

    def _limit(self, footprint):
        want = int(footprint * 1.5) + (2 << 20)
        want = max(want, 32 * 1024 * 1024)
        return min(want, self.vmem_budget)   # never request beyond ~75% of physical

    # ---- Forward ---------------------------------------------------------------
    def __call__(self, x):
        orig_shape = x.shape
        x2d = x.reshape(-1, self.in_features)
        M = x2d.shape[0]
        # Large row tile; partial last tile handled by masked grid (no x padding).
        tm = min(self.tm_req, _round_up(M, 8))

        if self.use_dense:
            vmem_limit = self._limit(self._dense_footprint(tm))
            y2d = _call_dense(x2d, self.W_p, self.bias_p,
                              tm=tm, tn=self.tn, tr=self.tr, vmem_limit=vmem_limit)
        else:
            # Shrink the row tile if the resident chain blocks would overflow VMEM
            # (output row-block is the tm-dependent term).
            while tm > 64 and self._chain_footprint(tm) > int(0.8 * self.vmem_budget):
                tm = max(64, tm // 2)
            vmem_limit = self._limit(self._chain_footprint(tm))
            y2d = _call_chain(x2d, self.A_p, self.C_p, self.bias_p,
                              tm=tm, tr=self.tr, vmem_limit=vmem_limit)

        y2d = y2d[:, :self.out_features]
        return y2d.reshape(*orig_shape[:-1], self.out_features)

    # Pure-JAX reference of the exact PyTorch forward (for verification).
    def reference(self, x):
        w = self.u @ self.s @ self.vh
        w = w.T if self.trans else w            # (out, in)
        return x @ w.T + self.bias


if __name__ == "__main__":
    key = jax.random.PRNGKey(0)
    k1, k2, kx1, kx2 = jax.random.split(key, 4)

    batch, seq = 2, 8

    # Case 1: out >= in (trans=False), full rank -> dense-fallback path, f32 params.
    layer1 = SVDLinearUSVhPallas(32, 48, bias=True, inner_dim_init_ratio=1.0,
                                 key=k1, param_dtype=jnp.float32)
    x1 = jax.random.normal(kx1, (batch, seq, 32), dtype=jnp.float32)
    y1 = jax.block_until_ready(layer1(x1))
    y1_ref = layer1.reference(x1)
    assert y1.shape == (batch, seq, 48)
    assert jnp.allclose(y1, y1_ref, atol=1e-4, rtol=1e-4), "mismatch (dense path)"

    # Case 2: out < in (trans=True), truncated rank -> factored chain path with
    # default bf16 params (bf16 MXU; looser tolerance vs. the f32 reference).
    layer2 = SVDLinearUSVhPallas(64, 48, bias=True, inner_dim_init_ratio=0.25,
                                 key=k2)
    x2 = jax.random.normal(kx2, (batch, seq, 64), dtype=jnp.float32)
    y2 = jax.block_until_ready(layer2(x2))
    y2_ref = layer2.reference(x2)
    assert y2.shape == (batch, seq, 48)
    assert jnp.allclose(y2, y2_ref, atol=5e-2, rtol=5e-2), "mismatch (chain path)"

    print("KERNEL_OK")
</pallas_src>

<mosaic_0001>
module attributes {stable_mosaic.version = 11 : i64} {
  func.func @_dense_kernel(%arg0: i32, %arg1: i32, %arg2: i32, %arg3: memref<16x32xf32, #tpu.memory_space<vmem>>, %arg4: memref<32x128xf32, #tpu.memory_space<vmem>>, %arg5: memref<1x128xf32, #tpu.memory_space<vmem>>, %arg6: memref<16x128xf32, #tpu.memory_space<vmem>>, %arg7: memref<16x128xf32, #tpu.memory_space<vmem>>) attributes {dimension_semantics = [#tpu.dimension_semantics<parallel>, #tpu.dimension_semantics<parallel>, #tpu.dimension_semantics<arbitrary>], iteration_bounds = array<i64: 1, 1, 1>, scalar_prefetch = 0 : i64, scratch_operands = 1 : i64, tpu.core_type = #tpu.core_type<tc>, window_params = [{transform_indices = @transform_0, window_bounds = array<i64: 16, 32>}, {transform_indices = @transform_1, window_bounds = array<i64: 32, 128>}, {transform_indices = @transform_2, window_bounds = array<i64: 1, 128>}, {transform_indices = @transform_3, window_bounds = array<i64: 16, 128>}]} {
    %c0_i32 = arith.constant 0 : i32
    %0 = arith.cmpi eq, %arg2, %c0_i32 : i32
    %1 = arith.extui %0 : i1 to i32
    %c0_i32_0 = arith.constant 0 : i32
    %2 = arith.cmpi ne, %1, %c0_i32_0 : i32
    scf.if %2 {
      %cst_10 = arith.constant 0.000000e+00 : f32
      %12 = vector.broadcast %cst_10 : f32 to vector<16x128xf32>
      %c0_11 = arith.constant 0 : index
      %c0_12 = arith.constant 0 : index
      %13 = vector.load %arg7[%c0_11, %c0_12] : memref<16x128xf32, #tpu.memory_space<vmem>>, vector<16x128xf32>
      tpu.vector_store %arg7[%c0_11, %c0_12], %12 {strides = array<i32>} : memref<16x128xf32, #tpu.memory_space<vmem>>, vector<16x128xf32>,
    } else {
    }
    %c0 = arith.constant 0 : index
    %c0_1 = arith.constant 0 : index
    %3 = vector.load %arg3[%c0, %c0_1] : memref<16x32xf32, #tpu.memory_space<vmem>>, vector<16x32xf32>
    %c0_2 = arith.constant 0 : index
    %c0_3 = arith.constant 0 : index
    %4 = vector.load %arg7[%c0_2, %c0_3] : memref<16x128xf32, #tpu.memory_space<vmem>>, vector<16x128xf32>
    %c0_4 = arith.constant 0 : index
    %c0_5 = arith.constant 0 : index
    %5 = vector.load %arg4[%c0_4, %c0_5] : memref<32x128xf32, #tpu.memory_space<vmem>>, vector<32x128xf32>
    %cst = arith.constant dense<0.000000e+00> : vector<16x128xf32>
    %6 = tpu.matmul %3, %5, %cst {dimension_numbers = #tpu.dot_dimension_numbers<[1], [0], [0], [1], [0, 0, 1, 1], [], []>} : vector<16x32xf32>, vector<32x128xf32>, vector<16x128xf32> -> vector<16x128xf32>
    %7 = arith.addf %4, %6 : vector<16x128xf32>
    %c0_6 = arith.constant 0 : index
    %c0_7 = arith.constant 0 : index
    %8 = vector.load %arg7[%c0_6, %c0_7] : memref<16x128xf32, #tpu.memory_space<vmem>>, vector<16x128xf32>
    tpu.vector_store %arg7[%c0_6, %c0_7], %7 {strides = array<i32>} : memref<16x128xf32, #tpu.memory_space<vmem>>, vector<16x128xf32>,
    %c0_i32_8 = arith.constant 0 : i32
    %9 = arith.cmpi eq, %arg2, %c0_i32_8 : i32
    %10 = arith.extui %9 : i1 to i32
    %c0_i32_9 = arith.constant 0 : i32
    %11 = arith.cmpi ne, %10, %c0_i32_9 : i32
    scf.if %11 {
      %c0_10 = arith.constant 0 : index
      %c0_11 = arith.constant 0 : index
      %12 = vector.load %arg7[%c0_10, %c0_11] : memref<16x128xf32, #tpu.memory_space<vmem>>, vector<16x128xf32>
      %c0_12 = arith.constant 0 : index
      %c0_13 = arith.constant 0 : index
      %13 = vector.load %arg5[%c0_12, %c0_13] : memref<1x128xf32, #tpu.memory_space<vmem>>, vector<1x128xf32>
      %14 = vector.broadcast %13 : vector<1x128xf32> to vector<16x128xf32>
      %15 = arith.addf %12, %14 : vector<16x128xf32>
      %c0_14 = arith.constant 0 : index
      %c0_15 = arith.constant 0 : index
      %16 = vector.load %arg6[%c0_14, %c0_15] : memref<16x128xf32, #tpu.memory_space<vmem>>, vector<16x128xf32>
      tpu.vector_store %arg6[%c0_14, %c0_15], %15 {strides = array<i32>} : memref<16x128xf32, #tpu.memory_space<vmem>>, vector<16x128xf32>,
    } else {
    }
    return
  }
  func.func @transform_0(%arg0: i32, %arg1: i32, %arg2: i32) -> (i32, i32) {
    %c0_i32 = arith.constant 0 : i32
    return %arg0, %arg2 : i32, i32
  }
  func.func @transform_1(%arg0: i32, %arg1: i32, %arg2: i32) -> (i32, i32) {
    %c0_i32 = arith.constant 0 : i32
    return %arg2, %arg1 : i32, i32
  }
  func.func @transform_2(%arg0: i32, %arg1: i32, %arg2: i32) -> (i32, i32) {
    %c0_i32 = arith.constant 0 : i32
    %c0_i32_0 = arith.constant 0 : i32
    return %c0_i32, %arg1 : i32, i32
  }
  func.func @transform_3(%arg0: i32, %arg1: i32, %arg2: i32) -> (i32, i32) {
    %c0_i32 = arith.constant 0 : i32
    return %arg0, %arg1 : i32, i32
  }
}

</mosaic_0001>

<llo_original>
// kernel: tpu_custom_call.1
$region0: #{tpu_custom_call.1}
  #allocation0 [shape = 'u32[]', space=smem, size = 0x4, offset = 0x4, fixed_abs, tag = 'smem constant byte address 0x4 - core index']
  #allocation1 [shape = 'u32[144,128]{1,0:T(1,128)}', space=vmem, size = 0x12000, scoped, tag = 'internal scratch']
  #allocation2 [shape = 'f32[16,128]{1,0:T(8,128)}', space=vmem, size = 0x2000, scoped, tag = 'scratch operand']
  %s0 = inlined_call_operand.hbm [shape: f32[16,32], index: 0, kind: input, shape index: {}]
  %s1 = inlined_call_operand.hbm [shape: f32[32,128], index: 1, kind: input, shape index: {}]
  %s2 = inlined_call_operand.vmem [shape: f32[1,128], index: 2, kind: input, shape index: {}]
  %s3 = inlined_call_operand.hbm [shape: f32[16,128], index: 3, kind: output, shape index: {}]
  %s4 = sld [smem:[#allocation0]]
  $region38: #{tpu_custom_call.1} parent=0
    _
  %s6 = ssub.s32 1, %s4
  %s7 = scalar_select 0, %s6, %s4
  $region1: #{tpu_custom_call.1} parent=0
    #allocation3 [shape = 'u8[8192]{0}', space=vmem, size = 0x2000, scoped, tag = 'input window, operand 0, single buffered']
    #allocation4 [shape = 's32[1]{0}', space=sflag, size = 0x4, scoped, tag = 'scoped memory for tpu_custom_call.1']
    #allocation5 [shape = 's32[1]{0}', space=sflag, size = 0x4, scoped, tag = 'scoped memory for tpu_custom_call.1']
    #allocation6 [shape = 'u8[16384]{0}', space=vmem, size = 0x4000, scoped, tag = 'input window, operand 1, single buffered']
    #allocation7 [shape = 's32[1]{0}', space=sflag, size = 0x4, scoped, tag = 'scoped memory for tpu_custom_call.1']
    #allocation8 [shape = 'u8[8192]{0}', space=vmem, size = 0x2000, scoped, tag = 'output window, operand 0, single buffered']
    %8 = vsyncpa [#allocation4], 0
    %9 = vsyncpa [#allocation7], 0
    %10 = vsyncpa [#allocation5], 0
    // Predicated region
    $region2: #{tpu_custom_call.1} parent=1 // pred_check
      _
    $region3: #{tpu_custom_call.1} parent=1 // pred_check_branch
      %12 = sbr.rel (0) target = $region5
    $region4: #{tpu_custom_call.1} parent=1 // pred_region
      %s14 = ssub.s32 256, 256
      %15 = vsyncadd [#allocation4], %s14
      %s16 = sshll.u32 [#allocation3], 4
      %s17 = int_to_ptr.vmem [resolvable:$true] %s16
      %22 = dma.hbm_to_vmem [thread:$0]  %s0, 256, %s17, [#allocation4], 128, 128, 8
    $region5: #{tpu_custom_call.1} parent=1 // pred_fallthru
      _
    // Predicated region
    $region6: #{tpu_custom_call.1} parent=1 // pred_check
      _
    $region7: #{tpu_custom_call.1} parent=1 // pred_check_branch
      %24 = sbr.rel (0) target = $region9
    $region8: #{tpu_custom_call.1} parent=1 // pred_region
      %s26 = ssub.s32 512, 512
      %27 = vsyncadd [#allocation7], %s26
      %s28 = sshll.u32 [#allocation6], 4
      %s29 = int_to_ptr.vmem [resolvable:$true] %s28
      %34 = dma.hbm_to_vmem [thread:$0]  %s1, 512, %s29, [#allocation7], 128, 128, 8
    $region9: #{tpu_custom_call.1} parent=1 // pred_fallthru
      _
    // Predicated region
    $region10: #{tpu_custom_call.1} parent=1 // pred_check
      _
    $region11: #{tpu_custom_call.1} parent=1 // pred_check_branch
      %36 = sbr.rel (0) target = $region13
    $region12: #{tpu_custom_call.1} parent=1 // pred_region
      _
    $region13: #{tpu_custom_call.1} parent=1 // pred_fallthru
      _
    // Predicated region
    $region14: #{tpu_custom_call.1} parent=1 // pred_check
      _
    $region15: #{tpu_custom_call.1} parent=1 // pred_check_branch
      %38 = sbr.rel (0) target = $region17
    $region16: #{tpu_custom_call.1} parent=1 // pred_region
      %39 = dma.done [#allocation4], 256
    $region17: #{tpu_custom_call.1} parent=1 // pred_fallthru
      _
    // Predicated region
    $region18: #{tpu_custom_call.1} parent=1 // pred_check
      _
    $region19: #{tpu_custom_call.1} parent=1 // pred_check_branch
      %41 = sbr.rel (0) target = $region21
    $region20: #{tpu_custom_call.1} parent=1 // pred_region
      %42 = dma.done [#allocation7], 512
    $region21: #{tpu_custom_call.1} parent=1 // pred_fallthru
      _
    %p43 = scmp.eq.s32.totalorder 0, 0
    // Predicated region
    $region22: #{tpu_custom_call.1} parent=1 // pred_check
      %p44 = pneg %p43
    $region23: #{tpu_custom_call.1} parent=1 // pred_check_branch
      %46 = sbr.rel (%p44) target = $region25
    $region24: #{tpu_custom_call.1} parent=1 // pred_region
      %47 = vst [vmem:[#allocation2] sm:$0xff] 0.0
      %48 = vst [vmem:[#allocation2 + $0x8] sm:$0xff] 0.0
    $region25: #{tpu_custom_call.1} parent=1 // pred_fallthru
      _
    %v49 = vld [vmem:[#allocation3] sm:$0xff]
    %v50 = vld [vmem:[#allocation3 + $0x8] sm:$0xff]
    %v51 = vld [vmem:[#allocation2] sm:$0xff]
    %v52 = vld [vmem:[#allocation2 + $0x8] sm:$0xff]
    %v53 = vld [vmem:[#allocation6] sm:$0xff]
    %v54 = vld [vmem:[#allocation6 + $0x8] sm:$0xff]
    %v55 = vld [vmem:[#allocation6 + $0x10] sm:$0xff]
    %v56 = vld [vmem:[#allocation6 + $0x18] sm:$0xff]
    %vm57 = vcmask 261120
    %v59 = vsel %vm57, %v49, 0
    %v62 = vsel %vm57, %v50, 0
    %64 = vmatprep.subr.mxu0 0.0
    %65 = vmatpush1.msra.mxu0 %v53
    %66 = vmatprep.subr.mxu0 0.0
    %67 = vmatpush1.msra.mxu0 %v54
    %68 = vmatprep.subr.mxu0 0.0
    %69 = vmatpush1.msra.mxu0 %v55
    %70 = vmatprep.subr.mxu0 0.0
    %71 = vmatpush1.msra.mxu0 %v56
    %72 = vmatprep.subr.mxu0 0.0
    %73 = vmatpush1.msra.mxu0 0.0
    %74 = vmatprep.subr.mxu0 0.0
    %75 = vmatpush1.msra.mxu0 0.0
    %76 = vmatprep.subr.mxu0 0.0
    %77 = vmatpush1.msra.mxu0 0.0
    %78 = vmatprep.subr.mxu0 0.0
    %79 = vmatpush1.msra.mxu0 0.0
    %80 = vmatprep.subr.mxu0 0.0
    %81 = vmatpush1.msra.mxu0 0.0
    %82 = vmatprep.subr.mxu0 0.0
    %83 = vmatpush1.msra.mxu0 0.0
    %84 = vmatprep.subr.mxu0 0.0
    %85 = vmatpush1.msra.mxu0 0.0
    %86 = vmatprep.subr.mxu0 0.0
    %87 = vmatpush1.msra.mxu0 0.0
    %88 = vmatprep.subr.mxu0 0.0
    %89 = vmatpush1.msra.mxu0 0.0
    %90 = vmatprep.subr.mxu0 0.0
    %91 = vmatpush1.msra.mxu0 0.0
    %92 = vmatprep.subr.mxu0 0.0
    %93 = vmatpush1.msra.mxu0 0.0
    %94 = vmatprep.subr.mxu0 0.0
    %95 = vmatpush1.msra.mxu0 0.0
    %96 = vmatprep.subr.mxu0 0.0
    %97 = vmatpush1.msra.mxu0 0.0
    %98 = vmatprep.subr.mxu0 0.0
    %99 = vmatpush1.msra.mxu0 0.0
    %100 = vmatprep.subr.mxu0 0.0
    %101 = vmatpush1.msra.mxu0 0.0
    %102 = vmatprep.subr.mxu0 0.0
    %103 = vmatpush1.msra.mxu0 0.0
    %104 = vmatprep.subr.mxu0 0.0
    %105 = vmatpush1.msra.mxu0 0.0
    %106 = vmatprep.subr.mxu0 0.0
    %107 = vmatpush1.msra.mxu0 0.0
    %108 = vmatprep.subr.mxu0 0.0
    %109 = vmatpush1.msra.mxu0 0.0
    %110 = vmatprep.subr.mxu0 0.0
    %111 = vmatpush1.msra.mxu0 0.0
    %112 = vmatprep.subr.mxu0 0.0
    %113 = vmatpush1.msra.mxu0 0.0
    %114 = vmatprep.subr.mxu0 0.0
    %115 = vmatpush1.msra.mxu0 0.0
    %116 = vmatprep.subr.mxu0 0.0
    %117 = vmatpush1.msra.mxu0 0.0
    %118 = vmatprep.subr.mxu0 0.0
    %119 = vmatpush1.msra.mxu0 0.0
    %120 = vmatprep.subr.mxu0 0.0
    %121 = vmatpush1.msra.mxu0 0.0
    %122 = vmatprep.subr.mxu0 0.0
    %123 = vmatpush1.msra.mxu0 0.0
    %124 = vmatprep.subr.mxu0 0.0
    %125 = vmatpush1.msra.mxu0 0.0
    %126 = vmatprep.subr.mxu0 0.0
    %127 = vmatpush1.msra.mxu0 0.0
    %128 = vmatprep.mubr.f32.mxu0 0.0
    %129 = vmatmul.mubr.f32.gmra.mrb[0].mxu0 %v59
    %v130 = vpop.f32.mrb[0].mxu0
    %v131 = vadd.f32 0.0, %v130
    %v132 = vpop.f32.mrb[0].mxu0
    %133 = vmatprep.mubr.f32.mxu0 0.0
    %134 = vmatmul.mubr.f32.gmra.mrb[0].mxu0 %v62
    %v135 = vpop.f32.mrb[0].mxu0
    %v136 = vadd.f32 0.0, %v135
    %v137 = vpop.f32.mrb[0].mxu0
    %138 = vdwg.mxu0
    %v139 = vadd.f32 %v51, %v131
    %v140 = vadd.f32 %v52, %v136
    %141 = vst [vmem:[#allocation2] sm:$0xff] %v139
    %142 = vst [vmem:[#allocation2 + $0x8] sm:$0xff] %v140
    // Predicated region
    $region26: #{tpu_custom_call.1} parent=1 // pred_check
      %p143 = pneg %p43
    $region27: #{tpu_custom_call.1} parent=1 // pred_check_branch
      %145 = sbr.rel (%p143) target = $region29
    $region28: #{tpu_custom_call.1} parent=1 // pred_region
      %v146 = vld [vmem:[#allocation2] sm:$0xff]
      %v147 = vld [vmem:[#allocation2 + $0x8] sm:$0xff]
      %v148 = vld [vmem:[%s2] sm:$0x1]
      %v150 = vlaneseq
      %v151 = vshrl.u32 %v150, 7
      %v152 = vsub.s32 0, %v151
      %v153 = vrot.slane %v148, %v152
      %v155 = vadd.f32 %v146, %v153
      %v156 = vadd.f32 %v147, %v153
      %157 = vst [vmem:[#allocation8] sm:$0xff] %v155
      %158 = vst [vmem:[#allocation8 + $0x8] sm:$0xff] %v156
    $region29: #{tpu_custom_call.1} parent=1 // pred_fallthru
      _
    // Predicated region
    $region30: #{tpu_custom_call.1} parent=1 // pred_check
      _
    $region31: #{tpu_custom_call.1} parent=1 // pred_check_branch
      %160 = sbr.rel (0) target = $region33
    $region32: #{tpu_custom_call.1} parent=1 // pred_region
      %s162 = ssub.s32 256, 256
      %163 = vsyncadd [#allocation5], %s162
      %s164 = sshll.u32 [#allocation8], 4
      %s165 = int_to_ptr.vmem [resolvable:$true] %s164
      %170 = dma.vmem_to_hbm [thread:$0]  %s165, 256, %s3, [#allocation5], 128, 128, 8
    $region33: #{tpu_custom_call.1} parent=1 // pred_fallthru
      _
    // Predicated region
    $region34: #{tpu_custom_call.1} parent=1 // pred_check
      _
    $region35: #{tpu_custom_call.1} parent=1 // pred_check_branch
      %172 = sbr.rel (0) target = $region37
    $region36: #{tpu_custom_call.1} parent=1 // pred_region
      %173 = dma.done [#allocation5], 256
    $region37: #{tpu_custom_call.1} parent=1 // pred_fallthru
      _
    %174 = vsyncpa [#allocation4], 1
    %175 = vsyncpa [#allocation7], 1
    %176 = vsyncpa [#allocation5], 1

</llo_original>
